<compile_context>
chip_gen: v7x
topology: tpu7x:2x2x1
jax: 0.10.0
libtpu: 0.0.40
codegen_flags: <defaults>
</compile_context>

<pallas_src>
import functools

import jax
import jax.numpy as jnp
from jax.experimental import pallas as pl
from jax.experimental.pallas import tpu as pltpu


def _round_up(x, m):
    return (x + m - 1) // m * m


def mlp_kernel(x_ref, w1_ref, b1_ref, w2_ref, b2_ref, o_ref):
    # x_ref : (TILE_B, input_dim)  VMEM (tiled over the batch grid)
    # w1_ref: (input_dim, H_PAD)   VMEM (resident across grid steps)
    # b1_ref: (1, H_PAD)           VMEM (resident)
    # w2_ref: (1, H_PAD)           VMEM (resident)  -- second layer as a row vector
    # b2_ref: (1, 1)               SMEM scalar
    # o_ref : (1, TILE_B)          VMEM, lane-dense output row
    h = jnp.dot(x_ref[...], w1_ref[...], preferred_element_type=jnp.float32)  # MXU
    h = jnp.maximum(h + b1_ref[...], 0.0)                                     # VPU bias + ReLU
    # Dropout(p=0.2) is identity at inference.
    # Second layer (out_features=1): VPU multiply + lane reduction instead of an
    # N=1 MXU matmul.
    out = jnp.sum(h * w2_ref[...], axis=-1) + b2_ref[0, 0]                    # (TILE_B,)
    o_ref[...] = out[None, :].astype(o_ref.dtype)                             # (1, TILE_B)


@functools.partial(jax.jit, static_argnames=("tile_b",))
def simple_nn_forward(x, w1, b1, w2, b2, *, tile_b=512):
    """Fused forward: relu(x @ w1 + b1) @ w2 + b2, returned as (batch, 1)."""
    batch, input_dim = x.shape
    hidden = w1.shape[1]

    h_pad = _round_up(hidden, 128)                 # lane-align the hidden dim
    tile_b = min(tile_b, _round_up(batch, 128))    # keep tiles VMEM-friendly
    batch_p = _round_up(batch, tile_b)
    n_tiles = batch_p // tile_b

    # Zero padding: padded hidden columns give relu(0 + 0) * 0 = 0 contribution;
    # padded batch rows are sliced away below.
    x_p = jnp.pad(x.astype(jnp.float32), ((0, batch_p - batch), (0, 0)))
    w1_p = jnp.pad(w1.astype(jnp.float32), ((0, 0), (0, h_pad - hidden)))
    b1_p = jnp.pad(b1.reshape(1, hidden).astype(jnp.float32),
                   ((0, 0), (0, h_pad - hidden)))
    w2_row = jnp.pad(w2.reshape(1, hidden).astype(jnp.float32),
                     ((0, 0), (0, h_pad - hidden)))
    b2_s = b2.reshape(1, 1).astype(jnp.float32)

    flops = 2 * batch_p * input_dim * h_pad + 3 * batch_p * h_pad
    bytes_accessed = 4 * (x_p.size + w1_p.size + b1_p.size + w2_row.size + 1 + batch_p)

    out_row = pl.pallas_call(
        mlp_kernel,
        out_shape=jax.ShapeDtypeStruct((1, batch_p), jnp.float32),
        grid=(n_tiles,),
        in_specs=[
            pl.BlockSpec((tile_b, input_dim), lambda i: (i, 0)),      # x tile (pipelined)
            pl.BlockSpec((input_dim, h_pad), lambda i: (0, 0)),       # W1 (resident)
            pl.BlockSpec((1, h_pad), lambda i: (0, 0)),               # b1 (resident)
            pl.BlockSpec((1, h_pad), lambda i: (0, 0)),               # w2 row (resident)
            pl.BlockSpec(memory_space=pltpu.MemorySpace.SMEM),        # b2 scalar
        ],
        out_specs=pl.BlockSpec((1, tile_b), lambda i: (0, i)),        # lane-dense output
        compiler_params=pltpu.CompilerParams(
            dimension_semantics=("parallel",),
            vmem_limit_bytes=48 << 20,
        ),
        cost_estimate=pl.CostEstimate(
            flops=flops, transcendentals=0, bytes_accessed=bytes_accessed),
    )(x_p, w1_p, b1_p, w2_row, b2_s)

    return out_row[0, :batch][:, None]


def init_params(key, input_dim, hidden_dim):
    """Deterministic init mimicking nn.Linear default (uniform +/- 1/sqrt(fan_in))."""
    k1, k2, k3, k4 = jax.random.split(key, 4)
    bound1 = 1.0 / jnp.sqrt(float(input_dim))
    bound2 = 1.0 / jnp.sqrt(float(hidden_dim))
    # Stored pre-transposed relative to PyTorch's (out_features, in_features) layout.
    w1 = jax.random.uniform(k1, (input_dim, hidden_dim), jnp.float32, -bound1, bound1)
    b1 = jax.random.uniform(k2, (1, hidden_dim), jnp.float32, -bound1, bound1)
    w2 = jax.random.uniform(k3, (hidden_dim, 1), jnp.float32, -bound2, bound2)
    b2 = jax.random.uniform(k4, (1, 1), jnp.float32, -bound2, bound2)
    return w1, b1, w2, b2


if __name__ == "__main__":
    batch, input_dim, hidden_dim = 8, 32, 64

    key = jax.random.PRNGKey(0)
    kx, kp = jax.random.split(key)
    x = jax.random.normal(kx, (batch, input_dim), jnp.float32)
    w1, b1, w2, b2 = init_params(kp, input_dim, hidden_dim)

    out = simple_nn_forward(x, w1, b1, w2, b2)
    out = jax.block_until_ready(out)

    # Reference check in plain JAX (dropout is identity at inference).
    ref = jnp.maximum(x @ w1 + b1, 0.0) @ w2 + b2
    assert out.shape == (batch, 1), out.shape
    assert jnp.allclose(out, ref, atol=1e-5, rtol=1e-5), float(jnp.abs(out - ref).max())

    print("KERNEL_OK")
</pallas_src>

<mosaic_0001>
module attributes {stable_mosaic.version = 11 : i64} {
  func.func @mlp_kernel(%arg0: i32, %arg1: memref<128x32xf32, #tpu.memory_space<vmem>>, %arg2: memref<32x128xf32, #tpu.memory_space<vmem>>, %arg3: memref<1x128xf32, #tpu.memory_space<vmem>>, %arg4: memref<1x128xf32, #tpu.memory_space<vmem>>, %arg5: memref<1x1xf32, #tpu.memory_space<smem>>, %arg6: memref<1x128xf32, #tpu.memory_space<vmem>>) attributes {dimension_semantics = [#tpu.dimension_semantics<parallel>], iteration_bounds = array<i64: 1>, scalar_prefetch = 0 : i64, scratch_operands = 0 : i64, tpu.core_type = #tpu.core_type<tc>, window_params = [{transform_indices = @transform_0, window_bounds = array<i64: 128, 32>}, {pipeline_mode = #tpu.pipeline_mode<synchronous>, transform_indices = @transform_1, window_bounds = array<i64: 32, 128>}, {pipeline_mode = #tpu.pipeline_mode<synchronous>, transform_indices = @transform_2, window_bounds = array<i64: 1, 128>}, {pipeline_mode = #tpu.pipeline_mode<synchronous>, transform_indices = @transform_3, window_bounds = array<i64: 1, 128>}, {transform_indices = @transform_4, window_bounds = array<i64: 1, 1>}, {transform_indices = @transform_5, window_bounds = array<i64: 1, 128>}]} {
    %c0 = arith.constant 0 : index
    %c0_0 = arith.constant 0 : index
    %0 = vector.load %arg1[%c0, %c0_0] : memref<128x32xf32, #tpu.memory_space<vmem>>, vector<128x32xf32>
    %c0_1 = arith.constant 0 : index
    %c0_2 = arith.constant 0 : index
    %1 = vector.load %arg2[%c0_1, %c0_2] : memref<32x128xf32, #tpu.memory_space<vmem>>, vector<32x128xf32>
    %cst = arith.constant dense<0.000000e+00> : vector<128x128xf32>
    %2 = tpu.matmul %0, %1, %cst {dimension_numbers = #tpu.dot_dimension_numbers<[1], [0], [0], [1], [0, 0, 1, 1], [], []>} : vector<128x32xf32>, vector<32x128xf32>, vector<128x128xf32> -> vector<128x128xf32>
    %c0_3 = arith.constant 0 : index
    %c0_4 = arith.constant 0 : index
    %3 = vector.load %arg3[%c0_3, %c0_4] : memref<1x128xf32, #tpu.memory_space<vmem>>, vector<1x128xf32>
    %4 = vector.broadcast %3 : vector<1x128xf32> to vector<128x128xf32>
    %5 = arith.addf %2, %4 : vector<128x128xf32>
    %cst_5 = arith.constant 0.000000e+00 : f32
    %6 = vector.broadcast %cst_5 : f32 to vector<128x128xf32>
    %7 = arith.maximumf %5, %6 : vector<128x128xf32>
    %c0_6 = arith.constant 0 : index
    %c0_7 = arith.constant 0 : index
    %8 = vector.load %arg4[%c0_6, %c0_7] : memref<1x128xf32, #tpu.memory_space<vmem>>, vector<1x128xf32>
    %9 = vector.broadcast %8 : vector<1x128xf32> to vector<128x128xf32>
    %10 = arith.mulf %7, %9 : vector<128x128xf32>
    %cst_8 = arith.constant dense<0.000000e+00> : vector<128xf32>
    %11 = vector.multi_reduction <add>, %10, %cst_8 [1] : vector<128x128xf32> to vector<128xf32>
    %c0_9 = arith.constant 0 : index
    %c0_10 = arith.constant 0 : index
    %12 = memref.load %arg5[%c0_9, %c0_10] : memref<1x1xf32, #tpu.memory_space<smem>>
    %13 = vector.broadcast %12 : f32 to vector<128xf32>
    %14 = arith.addf %11, %13 : vector<128xf32>
    %15 = vector.shape_cast %14 : vector<128xf32> to vector<1x128xf32>
    %c0_11 = arith.constant 0 : index
    %c0_12 = arith.constant 0 : index
    %16 = vector.load %arg6[%c0_11, %c0_12] : memref<1x128xf32, #tpu.memory_space<vmem>>, vector<1x128xf32>
    tpu.vector_store %arg6[%c0_11, %c0_12], %15 {strides = array<i32>} : memref<1x128xf32, #tpu.memory_space<vmem>>, vector<1x128xf32>,
    return
  }
  func.func @transform_0(%arg0: i32) -> (i32, i32) {
    %c0_i32 = arith.constant 0 : i32
    %c0_i32_0 = arith.constant 0 : i32
    return %arg0, %c0_i32 : i32, i32
  }
  func.func @transform_1(%arg0: i32) -> (i32, i32) {
    %c0_i32 = arith.constant 0 : i32
    %c0_i32_0 = arith.constant 0 : i32
    %c0_i32_1 = arith.constant 0 : i32
    return %c0_i32, %c0_i32_0 : i32, i32
  }
  func.func @transform_2(%arg0: i32) -> (i32, i32) {
    %c0_i32 = arith.constant 0 : i32
    %c0_i32_0 = arith.constant 0 : i32
    %c0_i32_1 = arith.constant 0 : i32
    return %c0_i32, %c0_i32_0 : i32, i32
  }
  func.func @transform_3(%arg0: i32) -> (i32, i32) {
    %c0_i32 = arith.constant 0 : i32
    %c0_i32_0 = arith.constant 0 : i32
    %c0_i32_1 = arith.constant 0 : i32
    return %c0_i32, %c0_i32_0 : i32, i32
  }
  func.func @transform_4(%arg0: i32) -> (i32, i32) {
    %c0_i32 = arith.constant 0 : i32
    %c0_i32_0 = arith.constant 0 : i32
    %c0_i32_1 = arith.constant 0 : i32
    return %c0_i32, %c0_i32_0 : i32, i32
  }
  func.func @transform_5(%arg0: i32) -> (i32, i32) {
    %c0_i32 = arith.constant 0 : i32
    %c0_i32_0 = arith.constant 0 : i32
    return %c0_i32, %arg0 : i32, i32
  }
}

</mosaic_0001>

<llo_original>
// kernel: simple_nn_forward.1
$region0: #{simple_nn_forward.1}
  #allocation0 [shape = 'u32[]', space=smem, size = 0x4, offset = 0x4, fixed_abs, tag = 'smem constant byte address 0x4 - core index']
  #allocation1 [shape = 'u32[144,128]{1,0:T(1,128)}', space=vmem, size = 0x12000, scoped, tag = 'internal scratch']
  #allocation2 [shape = 'f32[1,1]{1,0:T(1,128)S(6)}', space=smem, size = 0x200, scoped, tag = 'scoped memory for simple_nn_forward.1']
  %s0 = inlined_call_operand.vmem [shape: f32[128,32], index: 0, kind: input, shape index: {}]
  %s1 = inlined_call_operand.vmem [shape: f32[32,128], index: 1, kind: input, shape index: {}]
  %s2 = inlined_call_operand.vmem [shape: f32[1,128], index: 2, kind: input, shape index: {}]
  %s3 = inlined_call_operand.vmem [shape: f32[1,128], index: 3, kind: input, shape index: {}]
  %s4 = inlined_call_operand.<no memory space> [shape: f32[1,1], index: 4, kind: input, shape index: {}]
  %s5 = inlined_call_operand.vmem [shape: f32[1,128], index: 5, kind: output, shape index: {}]
  %s6 = sld [smem:[#allocation0]]
  $region30: #{simple_nn_forward.1} parent=0
    _
  %s8 = ssub.s32 1, %s6
  %s9 = scalar_select 0, %s8, %s6
  %10 = sst [smem:[#allocation2]] %s4
  // Predicated region
  $region2: #{simple_nn_forward.1} parent=0 // pred_check
    _
  $region3: #{simple_nn_forward.1} parent=0 // pred_check_branch
    %12 = sbr.rel (0) target = $region5
  $region4: #{simple_nn_forward.1} parent=0 // pred_region
    _
  $region5: #{simple_nn_forward.1} parent=0 // pred_fallthru
    _
  // Predicated region
  $region6: #{simple_nn_forward.1} parent=0 // pred_check
    _
  $region7: #{simple_nn_forward.1} parent=0 // pred_check_branch
    %14 = sbr.rel (0) target = $region9
  $region8: #{simple_nn_forward.1} parent=0 // pred_region
    _
  $region9: #{simple_nn_forward.1} parent=0 // pred_fallthru
    _
  // Predicated region
  $region10: #{simple_nn_forward.1} parent=0 // pred_check
    _
  $region11: #{simple_nn_forward.1} parent=0 // pred_check_branch
    %16 = sbr.rel (0) target = $region13
  $region12: #{simple_nn_forward.1} parent=0 // pred_region
    _
  $region13: #{simple_nn_forward.1} parent=0 // pred_fallthru
    _
  // Predicated region
  $region14: #{simple_nn_forward.1} parent=0 // pred_check
    _
  $region15: #{simple_nn_forward.1} parent=0 // pred_check_branch
    %18 = sbr.rel (0) target = $region17
  $region16: #{simple_nn_forward.1} parent=0 // pred_region
    _
  $region17: #{simple_nn_forward.1} parent=0 // pred_fallthru
    _
  // Predicated region
  $region18: #{simple_nn_forward.1} parent=0 // pred_check
    _
  $region19: #{simple_nn_forward.1} parent=0 // pred_check_branch
    %20 = sbr.rel (0) target = $region21
  $region20: #{simple_nn_forward.1} parent=0 // pred_region
    _
  $region21: #{simple_nn_forward.1} parent=0 // pred_fallthru
    _
  %v21 = vld [vmem:[%s0] sm:$0xff]
  %v22 = vld [vmem:[%s0 + $0x8] sm:$0xff]
  %v23 = vld [vmem:[%s0 + $0x10] sm:$0xff]
  %v24 = vld [vmem:[%s0 + $0x18] sm:$0xff]
  %v25 = vld [vmem:[%s0 + $0x20] sm:$0xff]
  %v26 = vld [vmem:[%s0 + $0x28] sm:$0xff]
  %v27 = vld [vmem:[%s0 + $0x30] sm:$0xff]
  %v28 = vld [vmem:[%s0 + $0x38] sm:$0xff]
  %v29 = vld [vmem:[%s0 + $0x40] sm:$0xff]
  %v30 = vld [vmem:[%s0 + $0x48] sm:$0xff]
  %v31 = vld [vmem:[%s0 + $0x50] sm:$0xff]
  %v32 = vld [vmem:[%s0 + $0x58] sm:$0xff]
  %v33 = vld [vmem:[%s0 + $0x60] sm:$0xff]
  %v34 = vld [vmem:[%s0 + $0x68] sm:$0xff]
  %v35 = vld [vmem:[%s0 + $0x70] sm:$0xff]
  %v36 = vld [vmem:[%s0 + $0x78] sm:$0xff]
  %v37 = vld [vmem:[%s1] sm:$0xff]
  %v38 = vld [vmem:[%s1 + $0x8] sm:$0xff]
  %v39 = vld [vmem:[%s1 + $0x10] sm:$0xff]
  %v40 = vld [vmem:[%s1 + $0x18] sm:$0xff]
  %v41 = vld [vmem:[%s2] sm:$0x1]
  %v43 = vlaneseq
  %v44 = vshrl.u32 %v43, 7
  %v45 = vsub.s32 0, %v44
  %v46 = vrot.slane %v41, %v45
  %vm48 = vcmask 261120
  %v50 = vsel %vm48, %v21, 0
  %v53 = vsel %vm48, %v22, 0
  %v56 = vsel %vm48, %v23, 0
  %v59 = vsel %vm48, %v24, 0
  %v62 = vsel %vm48, %v25, 0
  %v65 = vsel %vm48, %v26, 0
  %v68 = vsel %vm48, %v27, 0
  %v71 = vsel %vm48, %v28, 0
  %v74 = vsel %vm48, %v29, 0
  %v77 = vsel %vm48, %v30, 0
  %v80 = vsel %vm48, %v31, 0
  %v83 = vsel %vm48, %v32, 0
  %v86 = vsel %vm48, %v33, 0
  %v89 = vsel %vm48, %v34, 0
  %v92 = vsel %vm48, %v35, 0
  %v95 = vsel %vm48, %v36, 0
  %97 = vmatprep.subr.mxu0 0.0
  %98 = vmatpush1.msra.mxu0 %v37
  %99 = vmatprep.subr.mxu0 0.0
  %100 = vmatpush1.msra.mxu0 %v38
  %101 = vmatprep.subr.mxu0 0.0
  %102 = vmatpush1.msra.mxu0 %v39
  %103 = vmatprep.subr.mxu0 0.0
  %104 = vmatpush1.msra.mxu0 %v40
  %105 = vmatprep.subr.mxu0 0.0
  %106 = vmatpush1.msra.mxu0 0.0
  %107 = vmatprep.subr.mxu0 0.0
  %108 = vmatpush1.msra.mxu0 0.0
  %109 = vmatprep.subr.mxu0 0.0
  %110 = vmatpush1.msra.mxu0 0.0
  %111 = vmatprep.subr.mxu0 0.0
  %112 = vmatpush1.msra.mxu0 0.0
  %113 = vmatprep.subr.mxu0 0.0
  %114 = vmatpush1.msra.mxu0 0.0
  %115 = vmatprep.subr.mxu0 0.0
  %116 = vmatpush1.msra.mxu0 0.0
  %117 = vmatprep.subr.mxu0 0.0
  %118 = vmatpush1.msra.mxu0 0.0
  %119 = vmatprep.subr.mxu0 0.0
  %120 = vmatpush1.msra.mxu0 0.0
  %121 = vmatprep.subr.mxu0 0.0
  %122 = vmatpush1.msra.mxu0 0.0
  %123 = vmatprep.subr.mxu0 0.0
  %124 = vmatpush1.msra.mxu0 0.0
  %125 = vmatprep.subr.mxu0 0.0
  %126 = vmatpush1.msra.mxu0 0.0
  %127 = vmatprep.subr.mxu0 0.0
  %128 = vmatpush1.msra.mxu0 0.0
  %129 = vmatprep.subr.mxu0 0.0
  %130 = vmatpush1.msra.mxu0 0.0
  %131 = vmatprep.subr.mxu0 0.0
  %132 = vmatpush1.msra.mxu0 0.0
  %133 = vmatprep.subr.mxu0 0.0
  %134 = vmatpush1.msra.mxu0 0.0
  %135 = vmatprep.subr.mxu0 0.0
  %136 = vmatpush1.msra.mxu0 0.0
  %137 = vmatprep.subr.mxu0 0.0
  %138 = vmatpush1.msra.mxu0 0.0
  %139 = vmatprep.subr.mxu0 0.0
  %140 = vmatpush1.msra.mxu0 0.0
  %141 = vmatprep.subr.mxu0 0.0
  %142 = vmatpush1.msra.mxu0 0.0
  %143 = vmatprep.subr.mxu0 0.0
  %144 = vmatpush1.msra.mxu0 0.0
  %145 = vmatprep.subr.mxu0 0.0
  %146 = vmatpush1.msra.mxu0 0.0
  %147 = vmatprep.subr.mxu0 0.0
  %148 = vmatpush1.msra.mxu0 0.0
  %149 = vmatprep.subr.mxu0 0.0
  %150 = vmatpush1.msra.mxu0 0.0
  %151 = vmatprep.subr.mxu0 0.0
  %152 = vmatpush1.msra.mxu0 0.0
  %153 = vmatprep.subr.mxu0 0.0
  %154 = vmatpush1.msra.mxu0 0.0
  %155 = vmatprep.subr.mxu0 0.0
  %156 = vmatpush1.msra.mxu0 0.0
  %157 = vmatprep.subr.mxu0 0.0
  %158 = vmatpush1.msra.mxu0 0.0
  %159 = vmatprep.subr.mxu0 0.0
  %160 = vmatpush1.msra.mxu0 0.0
  %161 = vmatprep.mubr.f32.mxu0 0.0
  %162 = vmatmul.mubr.f32.gmra.mrb[0].mxu0 %v50
  %v163 = vpop.f32.mrb[0].mxu0
  %v164 = vadd.f32 %v46, %v163
  %v165 = vpop.f32.mrb[0].mxu0
  %166 = vmatprep.mubr.f32.mxu0 0.0
  %167 = vmatmul.mubr.f32.gmra.mrb[0].mxu0 %v53
  %v168 = vpop.f32.mrb[0].mxu0
  %v169 = vadd.f32 %v46, %v168
  %v170 = vpop.f32.mrb[0].mxu0
  %171 = vmatprep.mubr.f32.mxu0 0.0
  %172 = vmatmul.mubr.f32.gmra.mrb[0].mxu0 %v56
  %v173 = vpop.f32.mrb[0].mxu0
  %v174 = vadd.f32 %v46, %v173
  %v175 = vpop.f32.mrb[0].mxu0
  %176 = vmatprep.mubr.f32.mxu0 0.0
  %177 = vmatmul.mubr.f32.gmra.mrb[0].mxu0 %v59
  %v178 = vpop.f32.mrb[0].mxu0
  %v179 = vadd.f32 %v46, %v178
  %v180 = vpop.f32.mrb[0].mxu0
  %181 = vmatprep.mubr.f32.mxu0 0.0
  %182 = vmatmul.mubr.f32.gmra.mrb[0].mxu0 %v62
  %v183 = vpop.f32.mrb[0].mxu0
  %v184 = vadd.f32 %v46, %v183
  %v185 = vpop.f32.mrb[0].mxu0
  %186 = vmatprep.mubr.f32.mxu0 0.0
  %187 = vmatmul.mubr.f32.gmra.mrb[0].mxu0 %v65
  %v188 = vpop.f32.mrb[0].mxu0
  %v189 = vadd.f32 %v46, %v188
  %v190 = vpop.f32.mrb[0].mxu0
  %191 = vmatprep.mubr.f32.mxu0 0.0
  %192 = vmatmul.mubr.f32.gmra.mrb[0].mxu0 %v68
  %v193 = vpop.f32.mrb[0].mxu0
  %v194 = vadd.f32 %v46, %v193
  %v195 = vpop.f32.mrb[0].mxu0
  %196 = vmatprep.mubr.f32.mxu0 0.0
  %197 = vmatmul.mubr.f32.gmra.mrb[0].mxu0 %v71
  %v198 = vpop.f32.mrb[0].mxu0
  %v199 = vadd.f32 %v46, %v198
  %v200 = vpop.f32.mrb[0].mxu0
  %201 = vmatprep.mubr.f32.mxu0 0.0
  %202 = vmatmul.mubr.f32.gmra.mrb[0].mxu0 %v74
  %v203 = vpop.f32.mrb[0].mxu0
  %v204 = vadd.f32 %v46, %v203
  %v205 = vpop.f32.mrb[0].mxu0
  %206 = vmatprep.mubr.f32.mxu0 0.0
  %207 = vmatmul.mubr.f32.gmra.mrb[0].mxu0 %v77
  %v208 = vpop.f32.mrb[0].mxu0
  %v209 = vadd.f32 %v46, %v208
  %v210 = vpop.f32.mrb[0].mxu0
  %211 = vmatprep.mubr.f32.mxu0 0.0
  %212 = vmatmul.mubr.f32.gmra.mrb[0].mxu0 %v80
  %v213 = vpop.f32.mrb[0].mxu0
  %v214 = vadd.f32 %v46, %v213
  %v215 = vpop.f32.mrb[0].mxu0
  %216 = vmatprep.mubr.f32.mxu0 0.0
  %217 = vmatmul.mubr.f32.gmra.mrb[0].mxu0 %v83
  %v218 = vpop.f32.mrb[0].mxu0
  %v219 = vadd.f32 %v46, %v218
  %v220 = vpop.f32.mrb[0].mxu0
  %221 = vmatprep.mubr.f32.mxu0 0.0
  %222 = vmatmul.mubr.f32.gmra.mrb[0].mxu0 %v86
  %v223 = vpop.f32.mrb[0].mxu0
  %v224 = vadd.f32 %v46, %v223
  %v225 = vpop.f32.mrb[0].mxu0
  %226 = vmatprep.mubr.f32.mxu0 0.0
  %227 = vmatmul.mubr.f32.gmra.mrb[0].mxu0 %v89
  %v228 = vpop.f32.mrb[0].mxu0
  %v229 = vadd.f32 %v46, %v228
  %v230 = vpop.f32.mrb[0].mxu0
  %231 = vmatprep.mubr.f32.mxu0 0.0
  %232 = vmatmul.mubr.f32.gmra.mrb[0].mxu0 %v92
  %v233 = vpop.f32.mrb[0].mxu0
  %v234 = vadd.f32 %v46, %v233
  %v235 = vpop.f32.mrb[0].mxu0
  %236 = vmatprep.mubr.f32.mxu0 0.0
  %237 = vmatmul.mubr.f32.gmra.mrb[0].mxu0 %v95
  %v238 = vpop.f32.mrb[0].mxu0
  %v239 = vadd.f32 %v46, %v238
  %v240 = vpop.f32.mrb[0].mxu0
  %241 = vdwg.mxu0
  %v242 = vmax.f32 %v164, 0.0
  %v243 = vmax.f32 %v169, 0.0
  %v244 = vmax.f32 %v174, 0.0
  %v245 = vmax.f32 %v179, 0.0
  %v246 = vmax.f32 %v184, 0.0
  %v247 = vmax.f32 %v189, 0.0
  %v248 = vmax.f32 %v194, 0.0
  %v249 = vmax.f32 %v199, 0.0
  %v250 = vmax.f32 %v204, 0.0
  %v251 = vmax.f32 %v209, 0.0
  %v252 = vmax.f32 %v214, 0.0
  %v253 = vmax.f32 %v219, 0.0
  %v254 = vmax.f32 %v224, 0.0
  %v255 = vmax.f32 %v229, 0.0
  %v256 = vmax.f32 %v234, 0.0
  %v257 = vmax.f32 %v239, 0.0
  %v258 = vld [vmem:[%s3] sm:$0x1]
  %v260 = vlaneseq
  %v261 = vshrl.u32 %v260, 7
  %v262 = vsub.s32 0, %v261
  %v263 = vrot.slane %v258, %v262
  %v265 = vmul.f32 %v242, %v263
  %v266 = vmul.f32 %v243, %v263
  %v267 = vmul.f32 %v244, %v263
  %v268 = vmul.f32 %v245, %v263
  %v269 = vmul.f32 %v246, %v263
  %v270 = vmul.f32 %v247, %v263
  %v271 = vmul.f32 %v248, %v263
  %v272 = vmul.f32 %v249, %v263
  %v273 = vmul.f32 %v250, %v263
  %v274 = vmul.f32 %v251, %v263
  %v275 = vmul.f32 %v252, %v263
  %v276 = vmul.f32 %v253, %v263
  %v277 = vmul.f32 %v254, %v263
  %v278 = vmul.f32 %v255, %v263
  %v279 = vmul.f32 %v256, %v263
  %v280 = vmul.f32 %v257, %v263
  %281 = vadd.xlane.f32.xlu0 %v265
  %v282 = vpop.xlane.xlu0 %281
  %283 = vadd.xlane.f32.xlu0 %v266
  %v284 = vpop.xlane.xlu0 %283
  %285 = vadd.xlane.f32.xlu0 %v267
  %v286 = vpop.xlane.xlu0 %285
  %287 = vadd.xlane.f32.xlu0 %v268
  %v288 = vpop.xlane.xlu0 %287
  %289 = vadd.xlane.f32.xlu0 %v269
  %v290 = vpop.xlane.xlu0 %289
  %291 = vadd.xlane.f32.xlu0 %v270
  %v292 = vpop.xlane.xlu0 %291
  %293 = vadd.xlane.f32.xlu0 %v271
  %v294 = vpop.xlane.xlu0 %293
  %295 = vadd.xlane.f32.xlu0 %v272
  %v296 = vpop.xlane.xlu0 %295
  %297 = vadd.xlane.f32.xlu0 %v273
  %v298 = vpop.xlane.xlu0 %297
  %299 = vadd.xlane.f32.xlu0 %v274
  %v300 = vpop.xlane.xlu0 %299
  %301 = vadd.xlane.f32.xlu0 %v275
  %v302 = vpop.xlane.xlu0 %301
  %303 = vadd.xlane.f32.xlu0 %v276
  %v304 = vpop.xlane.xlu0 %303
  %305 = vadd.xlane.f32.xlu0 %v277
  %v306 = vpop.xlane.xlu0 %305
  %307 = vadd.xlane.f32.xlu0 %v278
  %v308 = vpop.xlane.xlu0 %307
  %309 = vadd.xlane.f32.xlu0 %v279
  %v310 = vpop.xlane.xlu0 %309
  %311 = vadd.xlane.f32.xlu0 %v280
  %v312 = vpop.xlane.xlu0 %311
  %s313 = sld [smem:[#allocation2]]
  %v314 = vstv %s313
  %v315 = vadd.f32 %v282, %v314
  %v316 = vadd.f32 %v284, %v314
  %v317 = vadd.f32 %v286, %v314
  %v318 = vadd.f32 %v288, %v314
  %v319 = vadd.f32 %v290, %v314
  %v320 = vadd.f32 %v292, %v314
  %v321 = vadd.f32 %v294, %v314
  %v322 = vadd.f32 %v296, %v314
  %v323 = vadd.f32 %v298, %v314
  %v324 = vadd.f32 %v300, %v314
  %v325 = vadd.f32 %v302, %v314
  %v326 = vadd.f32 %v304, %v314
  %v327 = vadd.f32 %v306, %v314
  %v328 = vadd.f32 %v308, %v314
  %v329 = vadd.f32 %v310, %v314
  %v330 = vadd.f32 %v312, %v314
  %v347 = vlaneseq
  %v348 = vand.u32 %v347, 127
  %v349 = vlaneseq
  %v350 = vshrl.u32 %v349, 7
  %v351 = vsub.s32 %v348, %v350
  %v352 = vrot.slane %v315, %v351
  %v353 = vadd.s32 %v348, 4294967288
  %v354 = vlaneseq
  %v355 = vshrl.u32 %v354, 7
  %v356 = vsub.s32 %v353, %v355
  %v357 = vrot.slane %v316, %v356
  %vm358 = vcmask 130112
  %v359 = vsel %vm358, %v357, %v352
  %v360 = vadd.s32 %v348, 4294967280
  %v361 = vlaneseq
  %v362 = vshrl.u32 %v361, 7
  %v363 = vsub.s32 %v360, %v362
  %v364 = vrot.slane %v317, %v363
  %vm365 = vcmask 195712
  %v366 = vsel %vm365, %v364, %v359
  %v367 = vadd.s32 %v348, 4294967272
  %v368 = vlaneseq
  %v369 = vshrl.u32 %v368, 7
  %v370 = vsub.s32 %v367, %v369
  %v371 = vrot.slane %v318, %v370
  %vm372 = vcmask 261312
  %v373 = vsel %vm372, %v371, %v366
  %v374 = vadd.s32 %v348, 4294967264
  %v375 = vlaneseq
  %v376 = vshrl.u32 %v375, 7
  %v377 = vsub.s32 %v374, %v376
  %v378 = vrot.slane %v319, %v377
  %vm379 = vcmask 326912
  %v380 = vsel %vm379, %v378, %v373
  %v381 = vadd.s32 %v348, 4294967256
  %v382 = vlaneseq
  %v383 = vshrl.u32 %v382, 7
  %v384 = vsub.s32 %v381, %v383
  %v385 = vrot.slane %v320, %v384
  %vm386 = vcmask 392512
  %v387 = vsel %vm386, %v385, %v380
  %v388 = vadd.s32 %v348, 4294967248
  %v389 = vlaneseq
  %v390 = vshrl.u32 %v389, 7
  %v391 = vsub.s32 %v388, %v390
  %v392 = vrot.slane %v321, %v391
  %vm393 = vcmask 458112
  %v394 = vsel %vm393, %v392, %v387
  %v395 = vadd.s32 %v348, 4294967240
  %v396 = vlaneseq
  %v397 = vshrl.u32 %v396, 7
  %v398 = vsub.s32 %v395, %v397
  %v399 = vrot.slane %v322, %v398
  %vm400 = vcmask 523712
  %v401 = vsel %vm400, %v399, %v394
  %v402 = vadd.s32 %v348, 4294967232
  %v403 = vlaneseq
  %v404 = vshrl.u32 %v403, 7
  %v405 = vsub.s32 %v402, %v404
  %v406 = vrot.slane %v323, %v405
  %vm407 = vcmask 589312
  %v408 = vsel %vm407, %v406, %v401
  %v409 = vadd.s32 %v348, 4294967224
  %v410 = vlaneseq
  %v411 = vshrl.u32 %v410, 7
  %v412 = vsub.s32 %v409, %v411
  %v413 = vrot.slane %v324, %v412
  %vm414 = vcmask 654912
  %v415 = vsel %vm414, %v413, %v408
  %v416 = vadd.s32 %v348, 4294967216
  %v417 = vlaneseq
  %v418 = vshrl.u32 %v417, 7
  %v419 = vsub.s32 %v416, %v418
  %v420 = vrot.slane %v325, %v419
  %vm421 = vcmask 720512
  %v422 = vsel %vm421, %v420, %v415
  %v423 = vadd.s32 %v348, 4294967208
  %v424 = vlaneseq
  %v425 = vshrl.u32 %v424, 7
  %v426 = vsub.s32 %v423, %v425
  %v427 = vrot.slane %v326, %v426
  %vm428 = vcmask 786112
  %v429 = vsel %vm428, %v427, %v422
  %v430 = vadd.s32 %v348, 4294967200
  %v431 = vlaneseq
  %v432 = vshrl.u32 %v431, 7
  %v433 = vsub.s32 %v430, %v432
  %v434 = vrot.slane %v327, %v433
  %vm435 = vcmask 851712
  %v436 = vsel %vm435, %v434, %v429
  %v437 = vadd.s32 %v348, 4294967192
  %v438 = vlaneseq
  %v439 = vshrl.u32 %v438, 7
  %v440 = vsub.s32 %v437, %v439
  %v441 = vrot.slane %v328, %v440
  %vm442 = vcmask 917312
  %v443 = vsel %vm442, %v441, %v436
  %v444 = vadd.s32 %v348, 4294967184
  %v445 = vlaneseq
  %v446 = vshrl.u32 %v445, 7
  %v447 = vsub.s32 %v444, %v446
  %v448 = vrot.slane %v329, %v447
  %vm449 = vcmask 982912
  %v450 = vsel %vm449, %v448, %v443
  %v451 = vadd.s32 %v348, 4294967176
  %v452 = vlaneseq
  %v453 = vshrl.u32 %v452, 7
  %v454 = vsub.s32 %v451, %v453
  %v455 = vrot.slane %v330, %v454
  %vm456 = vcmask 1048512
  %v457 = vsel %vm456, %v455, %v450
  %459 = vst [vmem:[%s5] sm:$0x1] %v457
  // Predicated region
  $region22: #{simple_nn_forward.1} parent=0 // pred_check
    _
  $region23: #{simple_nn_forward.1} parent=0 // pred_check_branch
    %461 = sbr.rel (0) target = $region25
  $region24: #{simple_nn_forward.1} parent=0 // pred_region
    _
  $region25: #{simple_nn_forward.1} parent=0 // pred_fallthru
    _
  // Predicated region
  $region26: #{simple_nn_forward.1} parent=0 // pred_check
    _
  $region27: #{simple_nn_forward.1} parent=0 // pred_check_branch
    %463 = sbr.rel (0) target = $region29
  $region28: #{simple_nn_forward.1} parent=0 // pred_region
    _
  $region29: #{simple_nn_forward.1} parent=0 // pred_fallthru
    _

</llo_original>
